<compile_context>
chip_gen: v6e
topology: v6e:2x2x1
jax: 0.10.0
libtpu: 0.0.40
codegen_flags: <defaults>
</compile_context>

<pallas_src>
import functools

import jax
import jax.numpy as jnp
from jax.experimental import pallas as pl
from jax.experimental.pallas import tpu as pltpu

_LANE = 128
_SUBLANE = 8


# ----------------------------------------------------------------------------
# Kernels
# ----------------------------------------------------------------------------
def _linear_full_k_kernel(x_ref, w_ref, b_ref, o_ref, *, compute_dtype):
    """o = x @ w + b with the full K dimension resident in the block."""
    x = x_ref[...]
    w = w_ref[...]
    if compute_dtype is not None:
        x = x.astype(compute_dtype)
        w = w.astype(compute_dtype)
    acc = jnp.dot(x, w, preferred_element_type=jnp.float32)
    o_ref[...] = (acc + b_ref[...].astype(jnp.float32)).astype(o_ref.dtype)


def _linear_k_tiled_f32_kernel(x_ref, w_ref, b_ref, o_ref, *, compute_dtype):
    """K-tiled fallback, f32 output: accumulate straight into o_ref (no scratch)."""
    kk = pl.program_id(2)

    @pl.when(kk == 0)
    def _init():
        o_ref[...] = jnp.broadcast_to(b_ref[...], o_ref.shape)

    x = x_ref[...]
    w = w_ref[...]
    if compute_dtype is not None:
        x = x.astype(compute_dtype)
        w = w.astype(compute_dtype)
    o_ref[...] += jnp.dot(x, w, preferred_element_type=jnp.float32)


def _linear_k_tiled_acc_kernel(x_ref, w_ref, b_ref, o_ref, acc_ref, *, compute_dtype):
    """K-tiled fallback for narrow output dtypes: f32 scratch accumulator."""
    kk = pl.program_id(2)

    @pl.when(kk == 0)
    def _init():
        acc_ref[...] = jnp.zeros_like(acc_ref)

    x = x_ref[...]
    w = w_ref[...]
    if compute_dtype is not None:
        x = x.astype(compute_dtype)
        w = w.astype(compute_dtype)
    acc_ref[...] += jnp.dot(x, w, preferred_element_type=jnp.float32)

    @pl.when(kk == pl.num_programs(2) - 1)
    def _finalize():
        o_ref[...] = (acc_ref[...] + b_ref[...].astype(jnp.float32)).astype(o_ref.dtype)


# ----------------------------------------------------------------------------
# Small helpers
# ----------------------------------------------------------------------------
def _round_up(x, mult):
    return ((x + mult - 1) // mult) * mult


def _choose_tile(dim, cap, unit):
    """Largest multiple of `unit` <= min(cap, dim) that divides `dim`.
    Falls back to `unit` (edge raggedness is handled with a cdiv grid)."""
    t = max((min(cap, dim) // unit) * unit, unit)
    while t > unit and dim % t:
        t -= unit
    return t


@functools.lru_cache(maxsize=None)
def _physical_vmem_bytes():
    try:
        cap = getattr(pltpu.get_tpu_info(), "vmem_capacity_bytes", None)
        if cap:
            return int(cap)
    except Exception:
        pass
    return 64 << 20  # conservative: v7x per-TensorCore VMEM


def _vmem_budget_bytes():
    # Leave ~40% headroom for Mosaic-internal scratch, semaphores, etc.
    return int(_physical_vmem_bytes() * 0.6)


# ----------------------------------------------------------------------------
# Parameters (one-time prep — NOT per forward call)
# ----------------------------------------------------------------------------
def _init_params(key, in_features, out_features, dtype=jnp.float32):
    # Matches nn.Linear init shapes: U(-k, k), k = 1/sqrt(in_features).
    kw, kb = jax.random.split(key)
    bound = 1.0 / (in_features ** 0.5)
    weight = jax.random.uniform(kw, (out_features, in_features), dtype, -bound, bound)
    bias = jax.random.uniform(kb, (out_features,), dtype, -bound, bound)
    return weight, bias


def prepare_linear_params(weight, bias, *, param_dtype=None):
    """One-time conversion of PyTorch-style nn.Linear params for the kernel.

    weight [OUT, IN] -> w_t [IN, OUT_pad]  (transposed once; OUT padded to a
                                            multiple of 128 so kernel stores
                                            are lane-dense)
    bias   [OUT]     -> b2d [1, OUT_pad]   (kept f32 for the f32 epilogue;
                                            padded columns are zero in BOTH W
                                            and bias so padded outputs are 0)
    """
    out_f, _ = weight.shape
    out_pad = _round_up(out_f, _LANE)
    w_t = weight.T
    b2d = bias.reshape(1, out_f).astype(jnp.float32)
    if out_pad != out_f:
        w_t = jnp.pad(w_t, ((0, 0), (0, out_pad - out_f)))
        b2d = jnp.pad(b2d, ((0, 0), (0, out_pad - out_f)))
    if param_dtype is not None:
        w_t = w_t.astype(param_dtype)  # e.g. bf16 — beneficial on v5e/v6e/v7x
    return w_t, b2d, out_f


# ----------------------------------------------------------------------------
# Forward wrapper
# ----------------------------------------------------------------------------
def stub_encoder_linear(stub, w_t, b2d, out_features, *, compute_dtype=None,
                        padded_output=False, max_block_m=512, max_block_n=None,
                        max_block_k=512, vmem_budget=None):
    """embed = stub @ W^T + b with pre-prepared (transposed, lane-padded) params."""
    m, k = stub.shape
    k_w, n = w_t.shape
    assert k == k_w, (stub.shape, w_t.shape)
    out_dtype = stub.dtype

    xb = jnp.dtype(stub.dtype).itemsize
    wb = jnp.dtype(w_t.dtype).itemsize
    ob = jnp.dtype(out_dtype).itemsize
    bb = jnp.dtype(b2d.dtype).itemsize
    budget = int(vmem_budget) if vmem_budget is not None else _vmem_budget_bytes()

    single_block_bytes = m * k * xb + k * n * wb + n * bb + m * n * ob

    if m < 256 and n <= 1024 and single_block_bytes <= budget:
        # Tiny problem (e.g. the 8x64x64 stub config): no grid, no pipeline
        # setup, everything resident in VMEM for a single kernel invocation.
        out = pl.pallas_call(
            functools.partial(_linear_full_k_kernel, compute_dtype=compute_dtype),
            out_shape=jax.ShapeDtypeStruct((m, n), out_dtype),
            in_specs=[pl.BlockSpec(memory_space=pltpu.VMEM)] * 3,
            out_specs=pl.BlockSpec(memory_space=pltpu.VMEM),
        )(stub, w_t, b2d)
        if padded_output or n == out_features:
            return out
        return out[:, :out_features]

    # ---- block-size selection under an explicit VMEM budget -----------------
    def block_bytes(bm_, bn_, bk_, with_acc):
        # 2x: every streamed operand is double-buffered by the Pallas pipeline.
        per = 2 * (bm_ * bk_ * xb + bk_ * bn_ * wb + bn_ * bb + bm_ * bn_ * ob)
        return per + (bm_ * bn_ * 4 if with_acc else 0)

    cap_m = max_block_m
    if m >= 256:
        # Guarantee >= 2 tiles along the parallel M axis (v7x has 2 TensorCores).
        cap_m = min(cap_m, _round_up((m + 1) // 2, _SUBLANE))
    bm = _choose_tile(m, cap_m, _SUBLANE)
    bn = _choose_tile(n, max_block_n or n, _LANE)
    bk = k

    # Prefer full-K blocks: no accumulator, no init/finalize, all-parallel grid.
    while block_bytes(bm, bn, bk, False) > budget and bn > _LANE:
        bn = _choose_tile(n, max(bn // 2, _LANE), _LANE)
    while block_bytes(bm, bn, bk, False) > budget and bm > 64:
        bm = _choose_tile(m, max(bm // 2, 64), _SUBLANE)

    k_tiled = block_bytes(bm, bn, bk, False) > budget
    needs_acc = jnp.dtype(out_dtype) != jnp.dtype(jnp.float32)
    if k_tiled:
        bk = _choose_tile(k, min(max_block_k, k), _LANE)
        while block_bytes(bm, bn, bk, needs_acc) > budget and bk > _LANE:
            bk = _choose_tile(k, max(bk // 2, _LANE), _LANE)
        while block_bytes(bm, bn, bk, needs_acc) > budget and bm > _SUBLANE:
            bm = _choose_tile(m, max(bm // 2, _SUBLANE), _SUBLANE)
        if k % bk:
            # Ragged K would corrupt the reduction (OOB reads feed the sum);
            # fall back to a single full-K block along K.
            bk, k_tiled = k, False

    grid_m = pl.cdiv(m, bm)      # ragged M edge blocks are safe (OOB writes masked)
    grid_n = n // bn             # n is lane-padded and bn | n by construction

    need = block_bytes(bm, bn, bk, k_tiled and needs_acc)
    vmem_limit = int(min(_physical_vmem_bytes(), max(need + (4 << 20), 32 << 20)))

    if not k_tiled:
        out = pl.pallas_call(
            functools.partial(_linear_full_k_kernel, compute_dtype=compute_dtype),
            out_shape=jax.ShapeDtypeStruct((m, n), out_dtype),
            grid=(grid_m, grid_n),
            in_specs=[
                pl.BlockSpec((bm, k), lambda i, j: (i, 0)),
                pl.BlockSpec((k, bn), lambda i, j: (0, j)),  # W resident when grid_n == 1
                pl.BlockSpec((1, bn), lambda i, j: (0, j)),
            ],
            out_specs=pl.BlockSpec((bm, bn), lambda i, j: (i, j)),
            compiler_params=pltpu.CompilerParams(
                dimension_semantics=("parallel", "parallel"),
                vmem_limit_bytes=vmem_limit),
        )(stub, w_t, b2d)
    else:
        grid = (grid_m, grid_n, k // bk)
        in_specs = [
            pl.BlockSpec((bm, bk), lambda i, j, kk: (i, kk)),
            pl.BlockSpec((bk, bn), lambda i, j, kk: (kk, j)),
            pl.BlockSpec((1, bn), lambda i, j, kk: (0, j)),
        ]
        out_spec = pl.BlockSpec((bm, bn), lambda i, j, kk: (i, j))
        cparams = pltpu.CompilerParams(
            dimension_semantics=("parallel", "parallel", "arbitrary"),
            vmem_limit_bytes=vmem_limit)
        if needs_acc:
            out = pl.pallas_call(
                functools.partial(_linear_k_tiled_acc_kernel, compute_dtype=compute_dtype),
                out_shape=jax.ShapeDtypeStruct((m, n), out_dtype),
                grid=grid, in_specs=in_specs, out_specs=out_spec,
                scratch_shapes=[pltpu.VMEM((bm, bn), jnp.float32)],
                compiler_params=cparams,
            )(stub, w_t, b2d)
        else:
            out = pl.pallas_call(
                functools.partial(_linear_k_tiled_f32_kernel, compute_dtype=compute_dtype),
                out_shape=jax.ShapeDtypeStruct((m, n), out_dtype),
                grid=grid, in_specs=in_specs, out_specs=out_spec,
                compiler_params=cparams,
            )(stub, w_t, b2d)

    if padded_output or n == out_features:
        return out
    # TODO(synk): downstream consumers should accept the lane-padded embedding
    # (padded_output=True) so this extra HBM round trip disappears entirely.
    return out[:, :out_features]


class StubEncoder:
    """Pallas/JAX port of the PyTorch StubEncoder (a single nn.Linear)."""

    def __init__(self, input_size=64, embed_size=64, *, key,
                 param_dtype=None, compute_dtype=None):
        self.in_features = input_size
        self.out_features = embed_size
        self.compute_dtype = compute_dtype
        # Raw nn.Linear-style params (kept for reference / state-dict parity).
        self.weight, self.bias = _init_params(key, input_size, embed_size)
        # Kernel-ready params: transposed + lane-padded ONCE here, not per call.
        self.w_t, self.b2d, _ = prepare_linear_params(
            self.weight, self.bias, param_dtype=param_dtype)

    def forward(self, stub, trajectory_data=None, agent_additional_inputs=None,
                additional_params=None, **block_kwargs):
        # trajectory_data / agent_additional_inputs / additional_params are
        # accepted for API parity with other encoders and ignored, exactly as
        # in the PyTorch module.
        del trajectory_data, agent_additional_inputs, additional_params
        output = stub_encoder_linear(stub, self.w_t, self.b2d, self.out_features,
                                     compute_dtype=self.compute_dtype,
                                     **block_kwargs)
        additional_costs = {}
        return output, additional_costs

    __call__ = forward


if __name__ == "__main__":
    root = jax.random.PRNGKey(0)
    k_enc, k_x, k_enc_big, k_x_big = jax.random.split(root, 4)

    # ---- Small config: StubEncoder defaults (input_size=64, embed_size=64), batch=8.
    BATCH, INPUT_SIZE, EMBED_SIZE = 8, 64, 64
    enc = StubEncoder(INPUT_SIZE, EMBED_SIZE, key=k_enc)
    stub = jax.random.normal(k_x, (BATCH, INPUT_SIZE), jnp.float32)
    trajectory_data = jnp.zeros((BATCH, 4), jnp.float32)  # unused by forward

    out, costs = enc.forward(stub, trajectory_data)
    out = jax.block_until_ready(out)
    ref = stub @ enc.weight.T + enc.bias
    assert out.shape == (BATCH, EMBED_SIZE)
    assert costs == {}
    assert jnp.allclose(out, ref, atol=1e-5, rtol=1e-5)

    # ---- Lane-padded output variant (no post-kernel narrowing slice at all).
    out_pad, _ = enc.forward(stub, trajectory_data, padded_output=True)
    out_pad = jax.block_until_ready(out_pad)
    assert out_pad.shape[1] % 128 == 0
    assert jnp.allclose(out_pad[:, :EMBED_SIZE], ref, atol=1e-5, rtol=1e-5)

    # ---- Moderate config: full-K (M, N) "parallel" grid, W resident, no accumulator.
    M, K, N = 512, 512, 384
    enc_big = StubEncoder(K, N, key=k_enc_big)
    stub_big = jax.random.normal(k_x_big, (M, K), jnp.float32)
    out_big, _ = enc_big.forward(stub_big)
    out_big = jax.block_until_ready(out_big)
    ref_big = stub_big @ enc_big.weight.T + enc_big.bias
    assert out_big.shape == (M, N)
    assert jnp.allclose(out_big, ref_big, atol=2e-2, rtol=2e-2)

    # ---- Forced tiny VMEM budget: exercises the K-tiled f32 path (accumulates
    #      directly into o_ref, no scratch).
    out_kt, _ = enc_big.forward(stub_big, vmem_budget=600_000)
    out_kt = jax.block_until_ready(out_kt)
    assert jnp.allclose(out_kt, ref_big, atol=2e-2, rtol=2e-2)

    # ---- bf16 end-to-end (bf16 activations + bf16 weights, f32 accumulation):
    #      halves streamed HBM bytes on v5e/v6e/v7x.
    enc_bf16 = StubEncoder(K, N, key=k_enc_big, param_dtype=jnp.bfloat16)
    stub_bf16 = stub_big.astype(jnp.bfloat16)
    out_bf16, _ = enc_bf16.forward(stub_bf16)
    out_bf16 = jax.block_until_ready(out_bf16)
    assert jnp.allclose(out_bf16.astype(jnp.float32), ref_big, atol=8e-2, rtol=8e-2)

    # ---- Forced tiny VMEM budget on the bf16 config: exercises the K-tiled
    #      accumulator-scratch path for narrow output dtypes.
    out_bf16_kt, _ = enc_bf16.forward(stub_bf16, vmem_budget=300_000)
    out_bf16_kt = jax.block_until_ready(out_bf16_kt)
    assert jnp.allclose(out_bf16_kt.astype(jnp.float32), ref_big, atol=8e-2, rtol=8e-2)

    print("KERNEL_OK")
</pallas_src>

<mosaic_0001>
module attributes {stable_mosaic.version = 11 : i64} {
  func.func @_linear_full_k_kernel(%arg0: memref<8x64xf32, #tpu.memory_space<vmem>>, %arg1: memref<64x128xf32, #tpu.memory_space<vmem>>, %arg2: memref<1x128xf32, #tpu.memory_space<vmem>>, %arg3: memref<8x128xf32, #tpu.memory_space<vmem>>) attributes {dimension_semantics = [], scalar_prefetch = 0 : i64, scratch_operands = 0 : i64, tpu.core_type = #tpu.core_type<tc>} {
    %c0 = arith.constant 0 : index
    %c0_0 = arith.constant 0 : index
    %0 = vector.load %arg0[%c0, %c0_0] : memref<8x64xf32, #tpu.memory_space<vmem>>, vector<8x64xf32>
    %c0_1 = arith.constant 0 : index
    %c0_2 = arith.constant 0 : index
    %1 = vector.load %arg1[%c0_1, %c0_2] : memref<64x128xf32, #tpu.memory_space<vmem>>, vector<64x128xf32>
    %cst = arith.constant dense<0.000000e+00> : vector<8x128xf32>
    %2 = tpu.matmul %0, %1, %cst {dimension_numbers = #tpu.dot_dimension_numbers<[1], [0], [0], [1], [0, 0, 1, 1], [], []>} : vector<8x64xf32>, vector<64x128xf32>, vector<8x128xf32> -> vector<8x128xf32>
    %c0_3 = arith.constant 0 : index
    %c0_4 = arith.constant 0 : index
    %3 = vector.load %arg2[%c0_3, %c0_4] : memref<1x128xf32, #tpu.memory_space<vmem>>, vector<1x128xf32>
    %4 = vector.broadcast %3 : vector<1x128xf32> to vector<8x128xf32>
    %5 = arith.addf %2, %4 : vector<8x128xf32>
    %c0_5 = arith.constant 0 : index
    %c0_6 = arith.constant 0 : index
    %6 = vector.load %arg3[%c0_5, %c0_6] : memref<8x128xf32, #tpu.memory_space<vmem>>, vector<8x128xf32>
    tpu.vector_store %arg3[%c0_5, %c0_6], %5 {strides = array<i32>} : memref<8x128xf32, #tpu.memory_space<vmem>>, vector<8x128xf32>,
    return
  }
}

</mosaic_0001>

<llo_original>
// kernel: tpu_custom_call.1
$region0: #{tpu_custom_call.1}
  #allocation0 [shape = 'u32[]', space=smem, size = 0x4, offset = 0x4, fixed_abs, tag = 'smem constant byte address 0x4 - core index']
  #allocation1 [shape = 'u32[144,128]{1,0:T(1,128)}', space=vmem, size = 0x12000, scoped, tag = 'internal scratch']
  %s0 = inlined_call_operand.hbm [shape: f32[8,64], index: 0, kind: input, shape index: {}]
  %s1 = inlined_call_operand.hbm [shape: f32[64,128], index: 1, kind: input, shape index: {}]
  %s2 = inlined_call_operand.vmem [shape: f32[1,128], index: 2, kind: input, shape index: {}]
  %s3 = inlined_call_operand.hbm [shape: f32[8,128], index: 3, kind: output, shape index: {}]
  %s4 = sld [smem:[#allocation0]]
  $region30: #{tpu_custom_call.1} parent=0
    _
  %s6 = ssub.s32 1, %s4
  %s7 = scalar_select 0, %s6, %s4
  $region1: #{tpu_custom_call.1} parent=0
    #allocation2 [shape = 'u8[4096]{0}', space=vmem, size = 0x1000, scoped, tag = 'input window, operand 0, single buffered']
    #allocation3 [shape = 's32[1]{0}', space=sflag, size = 0x4, scoped, tag = 'scoped memory for tpu_custom_call.1']
    #allocation4 [shape = 's32[1]{0}', space=sflag, size = 0x4, scoped, tag = 'scoped memory for tpu_custom_call.1']
    #allocation5 [shape = 'u8[32768]{0}', space=vmem, size = 0x8000, scoped, tag = 'input window, operand 1, single buffered']
    #allocation6 [shape = 's32[1]{0}', space=sflag, size = 0x4, scoped, tag = 'scoped memory for tpu_custom_call.1']
    #allocation7 [shape = 'u8[4096]{0}', space=vmem, size = 0x1000, scoped, tag = 'output window, operand 0, single buffered']
    %8 = vsyncpa [#allocation3], 0
    %9 = vsyncpa [#allocation6], 0
    %10 = vsyncpa [#allocation4], 0
    // Predicated region
    $region2: #{tpu_custom_call.1} parent=1 // pred_check
      _
    $region3: #{tpu_custom_call.1} parent=1 // pred_check_branch
      %12 = sbr.rel (0) target = $region5
    $region4: #{tpu_custom_call.1} parent=1 // pred_region
      %s14 = ssub.s32 128, 128
      %15 = vsyncadd [#allocation3], %s14
      %s17 = sshll.u32 [#allocation2], 4
      %s18 = int_to_ptr.vmem [resolvable:$true] %s17
      %20 = dma.hbm_to_vmem [thread:$0]  %s0, 128, %s18, [#allocation3]
    $region5: #{tpu_custom_call.1} parent=1 // pred_fallthru
      _
    // Predicated region
    $region6: #{tpu_custom_call.1} parent=1 // pred_check
      _
    $region7: #{tpu_custom_call.1} parent=1 // pred_check_branch
      %22 = sbr.rel (0) target = $region9
    $region8: #{tpu_custom_call.1} parent=1 // pred_region
      %s24 = ssub.s32 1024, 1024
      %25 = vsyncadd [#allocation6], %s24
      %s26 = sshll.u32 [#allocation5], 4
      %s27 = int_to_ptr.vmem [resolvable:$true] %s26
      %32 = dma.hbm_to_vmem [thread:$0]  %s1, 1024, %s27, [#allocation6], 128, 128, 8
    $region9: #{tpu_custom_call.1} parent=1 // pred_fallthru
      _
    // Predicated region
    $region10: #{tpu_custom_call.1} parent=1 // pred_check
      _
    $region11: #{tpu_custom_call.1} parent=1 // pred_check_branch
      %34 = sbr.rel (0) target = $region13
    $region12: #{tpu_custom_call.1} parent=1 // pred_region
      _
    $region13: #{tpu_custom_call.1} parent=1 // pred_fallthru
      _
    // Predicated region
    $region14: #{tpu_custom_call.1} parent=1 // pred_check
      _
    $region15: #{tpu_custom_call.1} parent=1 // pred_check_branch
      %36 = sbr.rel (0) target = $region17
    $region16: #{tpu_custom_call.1} parent=1 // pred_region
      %37 = dma.done [#allocation3], 128
    $region17: #{tpu_custom_call.1} parent=1 // pred_fallthru
      _
    // Predicated region
    $region18: #{tpu_custom_call.1} parent=1 // pred_check
      _
    $region19: #{tpu_custom_call.1} parent=1 // pred_check_branch
      %39 = sbr.rel (0) target = $region21
    $region20: #{tpu_custom_call.1} parent=1 // pred_region
      %40 = dma.done [#allocation6], 1024
    $region21: #{tpu_custom_call.1} parent=1 // pred_fallthru
      _
    %v41 = vld [vmem:[#allocation2] sm:$0xff]
    %v42 = vld [vmem:[#allocation5] sm:$0xff]
    %v43 = vld [vmem:[#allocation5 + $0x8] sm:$0xff]
    %v44 = vld [vmem:[#allocation5 + $0x10] sm:$0xff]
    %v45 = vld [vmem:[#allocation5 + $0x18] sm:$0xff]
    %v46 = vld [vmem:[#allocation5 + $0x20] sm:$0xff]
    %v47 = vld [vmem:[#allocation5 + $0x28] sm:$0xff]
    %v48 = vld [vmem:[#allocation5 + $0x30] sm:$0xff]
    %v49 = vld [vmem:[#allocation5 + $0x38] sm:$0xff]
    %v50 = vld [vmem:[%s2] sm:$0x1]
    %v52 = vlaneseq
    %v53 = vshrl.u32 %v52, 7
    %v54 = vsub.s32 0, %v53
    %v55 = vrot.slane %v50, %v54
    %vm57 = vcmask 523264
    %v59 = vsel %vm57, %v41, 0
    %61 = vmatprep.subr.mxu0 0.0
    %62 = vmatpush1.msra.mxu0 0.0
    %63 = vmatprep.subr.mxu0 0.0
    %64 = vmatpush1.msra.mxu0 0.0
    %65 = vmatprep.subr.mxu0 0.0
    %66 = vmatpush1.msra.mxu0 0.0
    %67 = vmatprep.subr.mxu0 0.0
    %68 = vmatpush1.msra.mxu0 0.0
    %69 = vmatprep.subr.mxu0 0.0
    %70 = vmatpush1.msra.mxu0 0.0
    %71 = vmatprep.subr.mxu0 0.0
    %72 = vmatpush1.msra.mxu0 0.0
    %73 = vmatprep.subr.mxu0 0.0
    %74 = vmatpush1.msra.mxu0 0.0
    %75 = vmatprep.subr.mxu0 0.0
    %76 = vmatpush1.msra.mxu0 0.0
    %77 = vmatprep.subr.mxu0 0.0
    %78 = vmatpush1.msra.mxu0 %v49
    %79 = vmatprep.subr.mxu0 0.0
    %80 = vmatpush1.msra.mxu0 %v48
    %81 = vmatprep.subr.mxu0 0.0
    %82 = vmatpush1.msra.mxu0 %v47
    %83 = vmatprep.subr.mxu0 0.0
    %84 = vmatpush1.msra.mxu0 %v46
    %85 = vmatprep.subr.mxu0 0.0
    %86 = vmatpush1.msra.mxu0 %v45
    %87 = vmatprep.subr.mxu0 0.0
    %88 = vmatpush1.msra.mxu0 %v44
    %89 = vmatprep.subr.mxu0 0.0
    %90 = vmatpush1.msra.mxu0 %v43
    %91 = vmatprep.subr.mxu0 0.0
    %92 = vmatpush1.msra.mxu0 %v42
    %93 = vmatprep.subr.mxu0 0.0
    %94 = vmatpush2.msra.mxu0 0.0
    %95 = vmatprep.subr.mxu0 0.0
    %96 = vmatpush2.msra.mxu0 0.0
    %97 = vmatprep.subr.mxu0 0.0
    %98 = vmatpush2.msra.mxu0 0.0
    %99 = vmatprep.subr.mxu0 0.0
    %100 = vmatpush2.msra.mxu0 0.0
    %101 = vmatprep.subr.mxu0 0.0
    %102 = vmatpush2.msra.mxu0 0.0
    %103 = vmatprep.subr.mxu0 0.0
    %104 = vmatpush2.msra.mxu0 0.0
    %105 = vmatprep.subr.mxu0 0.0
    %106 = vmatpush2.msra.mxu0 0.0
    %107 = vmatprep.subr.mxu0 0.0
    %108 = vmatpush2.msra.mxu0 0.0
    %109 = vmatprep.subr.mxu0 0.0
    %110 = vmatpush2.msra.mxu0 0.0
    %111 = vmatprep.subr.mxu0 0.0
    %112 = vmatpush2.msra.mxu0 0.0
    %113 = vmatprep.subr.mxu0 0.0
    %114 = vmatpush2.msra.mxu0 0.0
    %115 = vmatprep.subr.mxu0 0.0
    %116 = vmatpush2.msra.mxu0 0.0
    %117 = vmatprep.subr.mxu0 0.0
    %118 = vmatpush2.msra.mxu0 0.0
    %119 = vmatprep.subr.mxu0 0.0
    %120 = vmatpush2.msra.mxu0 0.0
    %121 = vmatprep.subr.mxu0 0.0
    %122 = vmatpush2.msra.mxu0 0.0
    %123 = vmatprep.subr.mxu0 0.0
    %124 = vmatpush2.msra.mxu0 0.0
    %125 = vmatprep.mubr.f32.mxu0 0.0
    %126 = vmatmul.mubr.f32.gmra.mxu0 %v59
    %v127 = vpop.f32.mrf.mxu0
    %v128 = vadd.f32 %v55, %v127
    %v129 = vpop.f32.mrf.mxu0
    %130 = vdwg.mxu0
    %131 = vst [vmem:[#allocation7] sm:$0xff] %v128
    // Predicated region
    $region22: #{tpu_custom_call.1} parent=1 // pred_check
      _
    $region23: #{tpu_custom_call.1} parent=1 // pred_check_branch
      %133 = sbr.rel (0) target = $region25
    $region24: #{tpu_custom_call.1} parent=1 // pred_region
      %s135 = ssub.s32 128, 128
      %136 = vsyncadd [#allocation4], %s135
      %s138 = sshll.u32 [#allocation7], 4
      %s139 = int_to_ptr.vmem [resolvable:$true] %s138
      %141 = dma.vmem_to_hbm [thread:$0]  %s139, 128, %s3, [#allocation4]
    $region25: #{tpu_custom_call.1} parent=1 // pred_fallthru
      _
    // Predicated region
    $region26: #{tpu_custom_call.1} parent=1 // pred_check
      _
    $region27: #{tpu_custom_call.1} parent=1 // pred_check_branch
      %143 = sbr.rel (0) target = $region29
    $region28: #{tpu_custom_call.1} parent=1 // pred_region
      %144 = dma.done [#allocation4], 128
    $region29: #{tpu_custom_call.1} parent=1 // pred_fallthru
      _
    %145 = vsyncpa [#allocation3], 1
    %146 = vsyncpa [#allocation6], 1
    %147 = vsyncpa [#allocation4], 1

</llo_original>
